<compile_context>
chip_gen: v7x
topology: tpu7x:2x2x1
jax: 0.10.0
libtpu: 0.0.40
codegen_flags: <defaults>
</compile_context>

<pallas_src>
import jax
import jax.numpy as jnp
from jax import lax
from jax.experimental import pallas as pl
from jax.experimental.pallas import tpu as pltpu


_ONEHOT_MAX_ROWS = 2048   # one-hot MXU gather only below this stacked row count
_ONEHOT_ROW_ALIGN = 256   # pad stacked rows (MXU K / lane dim) to this multiple
_ONEHOT_MAX_TILE = 256    # ids per grid step, one-hot path (sweepable 256-512 on v6e)
_DMA_MAX_TILE = 64        # ids (= in-flight row DMAs) per grid step, HBM path


def _pick_tile(n: int, max_tile: int) -> int:
    """Tile size: multiple of 8 (sublane-aligned stores) and, when possible,
    at least 2 grid steps so the 'parallel' axis spans both v7x TensorCores."""
    n = max(int(n), 1)
    if n >= 2 * max_tile:
        return max_tile
    half = pl.cdiv(n, 2)
    return int(min(max_tile, max(8, pl.cdiv(half, 8) * 8)))


# ---------------------------------------------------------------------------
# Path 1: one-hot MXU gather (small bf16 tables, table resident in VMEM).
# ---------------------------------------------------------------------------
def _onehot_gather_kernel(ids_ref, table_ref, out_ref):
    ids = ids_ref[...]                                     # (tb, 1) int32
    tb = ids.shape[0]
    rows = table_ref.shape[0]
    # one-hot[r, e] = (ids[r] == e). Padded ids (-1) give an all-zero row, so
    # the kernel is bounds-safe by construction.  DEFAULT precision: a 0/1
    # bf16 one-hot row selects a single bf16 table row with f32 accumulation,
    # which is exact (no Precision.HIGHEST 6-pass emulation needed).
    iota = lax.broadcasted_iota(jnp.int32, (tb, rows), 1)
    onehot = (ids == iota).astype(table_ref.dtype)
    acc = jnp.dot(onehot, table_ref[...], preferred_element_type=jnp.float32)
    out_ref[...] = acc.astype(out_ref.dtype)               # one lane-dense store


def _onehot_lookup(table: jax.Array, ids: jax.Array) -> jax.Array:
    rows, dim = table.shape                 # rows pre-padded (init) to 256-multiple
    n = int(ids.shape[0])
    tb = _pick_tile(n, _ONEHOT_MAX_TILE)
    n_pad = pl.cdiv(max(n, 1), tb) * tb
    ids_pad = jnp.pad(ids.astype(jnp.int32), (0, n_pad - n), constant_values=-1)
    ids_pad = ids_pad.reshape(n_pad, 1)

    out = pl.pallas_call(
        _onehot_gather_kernel,
        out_shape=jax.ShapeDtypeStruct((n_pad, dim), table.dtype),
        grid=(n_pad // tb,),
        in_specs=[
            pl.BlockSpec((tb, 1), lambda i: (i, 0)),        # id tile
            # Full table, constant block index -> fetched once and revisited.
            # TODO(synk): pipeline_mode=pl.Buffered(1) would drop the unused
            # second table buffer and halve its VMEM footprint (v7x 64 MiB).
            pl.BlockSpec((rows, dim), lambda i: (0, 0)),
        ],
        out_specs=pl.BlockSpec((tb, dim), lambda i: (i, 0)),
        compiler_params=pltpu.CompilerParams(
            dimension_semantics=("parallel",),              # independent id tiles
            vmem_limit_bytes=32 * 1024 * 1024,              # > v5e's 16 MiB default
        ),
    )(ids_pad, table)
    return out[:n]


# ---------------------------------------------------------------------------
# Path 2: HBM-resident DMA row gather (f32 / quantized / large tables).
# ---------------------------------------------------------------------------
def _dma_gather_kernel(ids_ref, table_hbm, out_ref, sems):
    """One async row copy per id, all `tb` copies of a tile in flight at once,
    gathered straight into the pipelined VMEM output block."""
    tb, _ = out_ref.shape
    base = pl.program_id(0) * tb

    def _issue(r, carry):
        row = ids_ref[base + r]                             # scalar read from SMEM
        pltpu.make_async_copy(
            table_hbm.at[pl.ds(row, 1), :], out_ref.at[pl.ds(r, 1), :], sems.at[r]
        ).start()
        return carry

    lax.fori_loop(0, tb, _issue, 0)

    def _drain(r, carry):
        pltpu.make_async_copy(
            table_hbm.at[pl.ds(0, 1), :], out_ref.at[pl.ds(r, 1), :], sems.at[r]
        ).wait()
        return carry

    lax.fori_loop(0, tb, _drain, 0)


def _dma_lookup(table: jax.Array, ids: jax.Array) -> jax.Array:
    rows, dim = table.shape
    n = int(ids.shape[0])
    tb = _pick_tile(n, _DMA_MAX_TILE)
    n_pad = pl.cdiv(max(n, 1), tb) * tb
    # DMA reads are bounds-checked: clamp padded / out-of-range ids to row 0
    # (padded output rows are sliced off below).
    ids_pad = jnp.pad(jnp.clip(ids.astype(jnp.int32), 0, rows - 1), (0, n_pad - n))

    out = pl.pallas_call(
        _dma_gather_kernel,
        out_shape=jax.ShapeDtypeStruct((n_pad, dim), table.dtype),
        grid_spec=pltpu.PrefetchScalarGridSpec(
            num_scalar_prefetch=1,                          # ids -> SMEM
            grid=(n_pad // tb,),
            in_specs=[pl.BlockSpec(memory_space=pl.ANY)],   # table stays in HBM
            out_specs=pl.BlockSpec((tb, dim), lambda i, ids: (i, 0)),
            scratch_shapes=[pltpu.SemaphoreType.DMA((tb,))],
        ),
        compiler_params=pltpu.CompilerParams(
            dimension_semantics=("parallel",),
        ),
    )(ids_pad, table)
    return out[:n]


def pallas_embedding_lookup(table: jax.Array, ids: jax.Array) -> jax.Array:
    """Route: one-hot MXU gather for small bf16 tables; HBM DMA gather for
    everything else (f32, quantized dtypes — no int MXU on v7x — or >2K rows)."""
    if table.dtype == jnp.bfloat16 and table.shape[0] <= _ONEHOT_MAX_ROWS:
        return _onehot_lookup(table, ids)
    return _dma_lookup(table, ids)


# ---------------------------------------------------------------------------
# Model plumbing: stacking/padding hoisted to init, one pallas_call per group.
# ---------------------------------------------------------------------------
class _FusedTableGroup:
    """All tables of one collection sharing (embedding_dim, dtype); the stacked
    weight matrix and per-table row offsets are built ONCE here so forward only
    concatenates id lists and runs a single pallas_call."""

    def __init__(self, names, weights):
        self.names = list(names)
        self.dim = int(weights[0].shape[1])
        self.dtype = weights[0].dtype
        self.offsets, off = [], 0
        for w in weights:
            self.offsets.append(off)
            off += int(w.shape[0])
        self.num_rows = off
        stacked = weights[0] if len(weights) == 1 else jnp.concatenate(weights, axis=0)

        self.use_onehot = (
            self.dtype == jnp.bfloat16 and self.num_rows <= _ONEHOT_MAX_ROWS
        )
        if self.use_onehot:
            # Pad stacked rows (MXU K dim) to 256 (matches v6e/v7x 2x256x256
            # MXU; 128 suffices on v5e). Padded rows are never selected.
            rows_pad = pl.cdiv(self.num_rows, _ONEHOT_ROW_ALIGN) * _ONEHOT_ROW_ALIGN
            if rows_pad != self.num_rows:
                pad = jnp.zeros((rows_pad - self.num_rows, self.dim), self.dtype)
                stacked = jnp.concatenate([stacked, pad], axis=0)
        self.table = stacked                 # device-resident, never rebuilt

    def lookup(self, id_lists):
        parts, lens = [], []
        for name, off in zip(self.names, self.offsets):
            ids = id_lists[name].astype(jnp.int32)
            parts.append(ids + off if off else ids)
            lens.append(int(ids.shape[0]))
        all_ids = parts[0] if len(parts) == 1 else jnp.concatenate(parts)

        gathered = (
            _onehot_lookup(self.table, all_ids)
            if self.use_onehot
            else _dma_lookup(self.table, all_ids)
        )

        # TODO(synk): consumers that accept (offset, length) views into the
        # fused output would avoid these per-feature slice copies.
        out, start = {}, 0
        for name, ln in zip(self.names, lens):
            out[name] = gathered[start : start + ln]
            start += ln
        return out


class EmbeddingCollection:
    """tables: dict feature_name -> weight [num_embeddings, embedding_dim]."""

    def __init__(self, tables):
        self.tables = dict(tables)
        grouped = {}
        for name, w in self.tables.items():
            grouped.setdefault((int(w.shape[1]), w.dtype), []).append(name)
        self._groups = [
            _FusedTableGroup(names, [self.tables[n] for n in names])
            for names in grouped.values()
        ]

    def __call__(self, kjt):
        """kjt: dict feature_name -> {'values': int ids [N], 'lengths': [B]}."""
        out = {}
        for g in self._groups:
            vals = g.lookup({n: kjt[n]["values"] for n in g.names})
            for n, v in vals.items():
                out[n] = {"values": v, "lengths": kjt[n]["lengths"]}
        return out


class MyModel:
    def __init__(self, eb_configs, num_collection: int = 2):
        mid = len(eb_configs) // 2
        self.ebc1 = EmbeddingCollection(
            {c["feature_name"]: c["weight"] for c in eb_configs[:mid]}
        )
        self.ebc2 = EmbeddingCollection(
            {c["feature_name"]: c["weight"] for c in eb_configs[mid:]}
        )

    def forward(self, features1, features2):
        return [self.ebc1(features1), self.ebc2(features2)]


# ---------------------------------------------------------------------------
# Deterministic setup + run
# ---------------------------------------------------------------------------
def _make_kjt(key, feature_names, batch, num_embeddings, max_len=4):
    """Build a small synthetic KeyedJaggedTensor-like dict."""
    kjt = {}
    for name in feature_names:
        key, k1, k2 = jax.random.split(key, 3)
        lengths = jax.random.randint(k1, (batch,), 1, max_len + 1, dtype=jnp.int32)
        total = int(jnp.sum(lengths))
        values = jax.random.randint(k2, (total,), 0, num_embeddings, dtype=jnp.int32)
        kjt[name] = {"values": values, "lengths": lengths}
    return kjt, key


if __name__ == "__main__":
    key = jax.random.PRNGKey(0)

    num_tables = 4            # split 2 / 2 between ebc1 and ebc2
    num_embeddings = 64
    emb_dim = 128
    batch = 2

    eb_configs = []
    for t in range(num_tables):
        key, wk = jax.random.split(key)
        # ebc1 tables are f32 (-> bit-exact HBM DMA gather path),
        # ebc2 tables are bf16 (-> one-hot MXU gather path, also exact).
        dtype = jnp.float32 if t < num_tables // 2 else jnp.bfloat16
        weight = (
            jax.random.normal(wk, (num_embeddings, emb_dim), jnp.float32) * 0.02
        ).astype(dtype)
        eb_configs.append(
            dict(
                name=f"table_{t}",
                num_embeddings=num_embeddings,
                embedding_dim=emb_dim,
                feature_name=f"feature_{t}",
                weight=weight,
            )
        )

    model = MyModel(eb_configs, num_collection=2)

    feat1_names = [c["feature_name"] for c in eb_configs[: num_tables // 2]]
    feat2_names = [c["feature_name"] for c in eb_configs[num_tables // 2 :]]
    features1, key = _make_kjt(key, feat1_names, batch, num_embeddings)
    features2, key = _make_kjt(key, feat2_names, batch, num_embeddings)

    out = model.forward(features1, features2)
    jax.block_until_ready(out)

    # Correctness: both gather paths are bit-exact vs a plain-JAX row gather.
    ok = True
    for res, ebc, feats in (
        (out[0], model.ebc1, features1),
        (out[1], model.ebc2, features2),
    ):
        for name, w in ebc.tables.items():
            ref = w[feats[name]["values"]]
            ok &= bool(jnp.array_equal(res[name]["values"], ref))
            ok &= bool(jnp.array_equal(res[name]["lengths"], feats[name]["lengths"]))
    assert ok, "Pallas gather does not match reference"

    # Large-table routing check: >2K rows forces the HBM DMA path even for bf16.
    key, wk, ik = jax.random.split(key, 3)
    big = (jax.random.normal(wk, (4096, emb_dim), jnp.float32) * 0.02).astype(jnp.bfloat16)
    big_ids = jax.random.randint(ik, (300,), 0, 4096, dtype=jnp.int32)
    got = pallas_embedding_lookup(big, big_ids)
    jax.block_until_ready(got)
    assert bool(jnp.array_equal(got, big[big_ids])), "large-table DMA gather mismatch"

    print("KERNEL_OK")
</pallas_src>

<mosaic_0001>
module attributes {stable_mosaic.version = 11 : i64} {
  func.func @_dma_gather_kernel(%arg0: i32, %arg1: memref<16xi32, #tpu.memory_space<smem>>, %arg2: memref<128x128xf32, #tpu.memory_space<any>>, %arg3: memref<8x128xf32, #tpu.memory_space<vmem>>, %arg4: memref<8x!tpu.dma_semaphore, #tpu.memory_space<semaphore_mem>>) attributes {dimension_semantics = [#tpu.dimension_semantics<parallel>], iteration_bounds = array<i64: 2>, scalar_prefetch = 1 : i64, scratch_operands = 1 : i64, tpu.core_type = #tpu.core_type<tc>, window_params = [{}, {transform_indices = @transform_1, window_bounds = array<i64: 8, 128>}]} {
    %c8_i32 = arith.constant 8 : i32
    %0 = arith.muli %arg0, %c8_i32 : i32
    %c0_i32 = arith.constant 0 : i32
    %c8_i32_0 = arith.constant 8 : i32
    %1 = arith.addi %c0_i32, %c8_i32_0 : i32
    %c1_i32 = arith.constant 1 : i32
    scf.for %arg5 = %c0_i32 to %1 step %c1_i32  : i32 {
      %3 = arith.addi %0, %arg5 : i32
      %4 = arith.index_cast %3 : i32 to index
      %5 = memref.load %arg1[%4] : memref<16xi32, #tpu.memory_space<smem>>
      %c0_i32_6 = arith.constant 0 : i32
      %6 = tpu.memref_slice %arg2[%5, %c0_i32_6] : memref<128x128xf32, #tpu.memory_space<any>> -> memref<1x128xf32, #tpu.memory_space<any>>
      %c0_i32_7 = arith.constant 0 : i32
      %7 = tpu.memref_slice %arg3[%arg5, %c0_i32_7] : memref<8x128xf32, #tpu.memory_space<vmem>> -> memref<1x128xf32, #tpu.memory_space<vmem>>
      %8 = tpu.memref_slice %arg4[%arg5] : memref<8x!tpu.dma_semaphore, #tpu.memory_space<semaphore_mem>> -> memref<1x!tpu.dma_semaphore, #tpu.memory_space<semaphore_mem>>
      %9 = tpu.memref_squeeze %8 : memref<1x!tpu.dma_semaphore, #tpu.memory_space<semaphore_mem>> -> memref<!tpu.dma_semaphore, #tpu.memory_space<semaphore_mem>>
      tpu.enqueue_dma source(%6 : memref<1x128xf32, #tpu.memory_space<any>>) target(%7 : memref<1x128xf32, #tpu.memory_space<vmem>>) target_semaphore(%9 : memref<!tpu.dma_semaphore, #tpu.memory_space<semaphore_mem>>)
    }
    %c8_i32_1 = arith.constant 8 : i32
    %c0_i32_2 = arith.constant 0 : i32
    %c8_i32_3 = arith.constant 8 : i32
    %2 = arith.addi %c0_i32_2, %c8_i32_3 : i32
    %c1_i32_4 = arith.constant 1 : i32
    scf.for %arg5 = %c0_i32_2 to %2 step %c1_i32_4  : i32 {
      %c0_i32_6 = arith.constant 0 : i32
      %c0_i32_7 = arith.constant 0 : i32
      %3 = tpu.memref_slice %arg2[%c0_i32_6, %c0_i32_7] : memref<128x128xf32, #tpu.memory_space<any>> -> memref<1x128xf32, #tpu.memory_space<any>>
      %c0_i32_8 = arith.constant 0 : i32
      %4 = tpu.memref_slice %arg3[%arg5, %c0_i32_8] : memref<8x128xf32, #tpu.memory_space<vmem>> -> memref<1x128xf32, #tpu.memory_space<vmem>>
      %5 = tpu.memref_slice %arg4[%arg5] : memref<8x!tpu.dma_semaphore, #tpu.memory_space<semaphore_mem>> -> memref<1x!tpu.dma_semaphore, #tpu.memory_space<semaphore_mem>>
      %6 = tpu.memref_squeeze %5 : memref<1x!tpu.dma_semaphore, #tpu.memory_space<semaphore_mem>> -> memref<!tpu.dma_semaphore, #tpu.memory_space<semaphore_mem>>
      tpu.wait_dma2 semaphore(%6 : memref<!tpu.dma_semaphore, #tpu.memory_space<semaphore_mem>>) src(%3 : memref<1x128xf32, #tpu.memory_space<any>>) dst(%4 : memref<1x128xf32, #tpu.memory_space<vmem>>)
    }
    %c8_i32_5 = arith.constant 8 : i32
    return
  }
  func.func @transform_1(%arg0: i32, %arg1: memref<16xi32, #tpu.memory_space<smem>>) -> (i32, i32) {
    %c0_i32 = arith.constant 0 : i32
    %c0_i32_0 = arith.constant 0 : i32
    return %arg0, %c0_i32 : i32, i32
  }
}

</mosaic_0001>

<llo_original>
// kernel: tpu_custom_call.1
$region0: #{tpu_custom_call.1}
  #allocation0 [shape = 'u32[]', space=smem, size = 0x4, offset = 0x4, fixed_abs, tag = 'smem constant byte address 0x4 - core index']
  #allocation1 [shape = 'u32[144,128]{1,0:T(1,128)}', space=vmem, size = 0x12000, scoped, tag = 'internal scratch']
  #allocation2 [shape = 's32[8]{0}', space=sflag, size = 0x20, scoped, tag = 'scratch operand']
  #allocation3 [shape = 's32[1]{0}', space=sflag, size = 0x4, scoped, tag = 'scoped memory for tpu_custom_call.1']
  #allocation4 [shape = 'u8[512]{0}', space=smem, size = 0x200, scoped, tag = 'prefetched SMEM operand 0']
  #allocation7 [shape = 's32[]', space=sflag, size = 0x4, offset = 0, fixed_abs, tag = 'sflag constant byte address 0x0 - dummy sync flag']
  #allocation8 [shape = 's32[]', space=sflag, size = 0x4, offset = 0, fixed_abs, tag = 'sflag constant byte address 0x0 - dummy sync flag']
  #allocation9 [shape = 'u32[]', space=smem, size = 0x4, offset = 0x44, fixed_abs, tag = 'smem constant byte address 0x44 - assertion arg 0']
  #allocation10 [shape = 'u32[]', space=smem, size = 0x4, offset = 0x48, fixed_abs, tag = 'smem constant byte address 0x48 - assertion arg 1']
  %s0 = inlined_call_operand.hbm [shape: s32[16], index: 0, kind: input, shape index: {}]
  %s1 = inlined_call_operand.hbm [shape: f32[128,128], index: 1, kind: input, shape index: {}]
  %s2 = inlined_call_operand.hbm [shape: f32[16,128], index: 2, kind: output, shape index: {}]
  %s3 = sld [smem:[#allocation0]]
  $region43: #{tpu_custom_call.1} parent=0
    _
  %s5 = ssub.s32 1, %s3
  %s6 = scalar_select 0, %s5, %s3
  %8 = dma.hbm_to_smem %s0, 16, [#allocation4], [#allocation3]
  %9 = dma.done [#allocation3], 16
  %10 = sfence
  $region1: #{tpu_custom_call.1} parent=0
    #allocation5 [shape = 'u8[8192]{0}', space=vmem, size = 0x2000, scoped, tag = 'output window, operand 0']
    #allocation6 [shape = 's32[2]{0}', space=sflag, size = 0x8, scoped, tag = 'scoped memory for tpu_custom_call.1']
    %11 = vsyncpa [#allocation6], 0
    %s12 = scalar_lea.sflag [#allocation6], 1
    %13 = vsyncpa %s12, 0
    loop: start=0, step=1, limit=3
    $region2: #{tpu_custom_call.1} parent=1 // loop_pre_header
      _
    $region3: #{tpu_custom_call.1} parent=1 // loop_header
      %s15 = sphi 0, %s19
      %p16 = scmp.ge.s32.totalorder %s15, 3
      %s24 = sphi 0, %s26
      %s27 = sphi 0, %s24
      %s37 = sphi 0, %s27
    $region4: #{tpu_custom_call.1} parent=1 // loop_header_branch
      %18 = sbr.rel (%p16) target = $region8
    $region5: #{tpu_custom_call.1} parent=1 // loop_body
      %s20 = ssub.s32 %s15, 1
      %s21 = sadd.s32 %s15, 1
      %s22 = ssub.s32 %s15, %s21
      %p23 = scmp.eq.s32.totalorder %s22, 0
      %s25 = sadd.s32 %s24, 1
      %s26 = scalar_select %p23, %s24, %s25
      %p28 = pneg %p23
      %p29 = scmp.eq.s32.totalorder %s15, 1
      %p30 = por %p28, %p29
      %p31 = scmp.ne.s32.totalorder %s24, %s27
      %p32 = scmp.eq.s32.totalorder %s15, 0
      %p33 = por %p31, %p32
      %p34 = scmp.ne.s32.totalorder %s24, %s27
      %p35 = scmp.eq.s32.totalorder %s20, 1
      %p36 = por %p34, %p35
      %p38 = scmp.ne.s32.totalorder %s27, %s37
      %p39 = scmp.eq.s32.totalorder %s20, 0
      %p40 = por %p38, %p39
      %p41 = scmp.lt.s32.totalorder %s15, 2
      // Predicated region
      $region9: #{tpu_custom_call.1} parent=5 // pred_check
        %p42 = pneg %p41
      $region10: #{tpu_custom_call.1} parent=5 // pred_check_branch
        %44 = sbr.rel (%p42) target = $region12
      $region11: #{tpu_custom_call.1} parent=5 // pred_region
        %p45 = pneg %p33
        %p46 = pneg %p30
        %s47 = sand.u32 %s24, 1
        %s48 = scalar_lea.sflag [#allocation6], %s47
        %s49 = sand.u32 %s24, 1
        %s50 = smul.addr %s49, 8
        %s51 = scalar_lea.vmem [#allocation5], %s50
        %s52 = smul.u32 %s15, 8
        loop: start=0, step=1, limit=8
        $region13: #{tpu_custom_call.1} parent=11 // loop_pre_header
          _
        $region14: #{tpu_custom_call.1} parent=11 // loop_header
          %s54 = sphi 0, %s58
          %p55 = scmp.ge.s32.totalorder %s54, 8
        $region15: #{tpu_custom_call.1} parent=11 // loop_header_branch
          %57 = sbr.rel (%p55) target = $region19
        $region16: #{tpu_custom_call.1} parent=11 // loop_body
          %s59 = sadd.s32 %s52, %s54
          %s60 = sld [smem:[#allocation4 + %s59]]
          %s61 = smul.addr %s60, 16
          %s62 = scalar_lea.hbm %s1, %s61
          %s63 = scalar_lea.vmem %s51, %s54 [#allocation5]
          %s64 = scalar_lea.sflag [#allocation2], %s54
          // Predicated region
          $region20: #{tpu_custom_call.1} parent=16 // pred_check
            _
          $region21: #{tpu_custom_call.1} parent=16 // pred_check_branch
            %66 = sbr.rel target = $region23
          $region22: #{tpu_custom_call.1} parent=16 // pred_region
            %67 = sst [smem:[#allocation9]] [#allocation8]
            %68 = sst [smem:[#allocation10]] [#allocation7]
          $region23: #{tpu_custom_call.1} parent=16 // pred_fallthru
            _
          %70 = shalt.err (0)
          %s72 = sshll.u32 %s63, 4
          %s73 = int_to_ptr.vmem [resolvable:$true] %s72
          %75 = dma.hbm_to_vmem [thread:$0]  %s62, 16, %s73, %s64
        $region17: #{tpu_custom_call.1} parent=11 // loop_footer
          %s58 = sadd.s32 1, %s54
        $region18: #{tpu_custom_call.1} parent=11 // loop_footer_branch
          %53 = sbr.rel target = $region14
        $region19: #{tpu_custom_call.1} parent=11 // loop_exit
          _
        loop: start=0, step=1, limit=8
        $region24: #{tpu_custom_call.1} parent=11 // loop_pre_header
          _
        $region25: #{tpu_custom_call.1} parent=11 // loop_header
          %s77 = sphi 0, %s81
          %p78 = scmp.ge.s32.totalorder %s77, 8
        $region26: #{tpu_custom_call.1} parent=11 // loop_header_branch
          %80 = sbr.rel (%p78) target = $region30
        $region27: #{tpu_custom_call.1} parent=11 // loop_body
          %s82 = scalar_lea.sflag [#allocation2], %s77
          %s83 = smul.u32 1, 1
          %s84 = sshll.u32 %s83, 4
          %85 = dma.done %s82, %s84
        $region28: #{tpu_custom_call.1} parent=11 // loop_footer
          %s81 = sadd.s32 1, %s77
        $region29: #{tpu_custom_call.1} parent=11 // loop_footer_branch
          %76 = sbr.rel target = $region25
        $region30: #{tpu_custom_call.1} parent=11 // loop_exit
          _
        %s86 = sand.u32 %s24, 1
        %s87 = scalar_lea.sflag [#allocation6], %s86
        %s88 = sand.u32 %s24, 1
        %s89 = smul.addr %s88, 8
        %s90 = scalar_lea.vmem [#allocation5], %s89
        // Predicated region
        $region31: #{tpu_custom_call.1} parent=11 // pred_check
          %p91 = pneg %p30
        $region32: #{tpu_custom_call.1} parent=11 // pred_check_branch
          %93 = sbr.rel (%p91) target = $region34
        $region33: #{tpu_custom_call.1} parent=11 // pred_region
          %s95 = ssub.s32 128, 128
          %96 = vsyncadd %s87, %s95
          %s97 = smul.addr %s15, 128
          %s98 = scalar_lea.hbm %s2, %s97
          %s100 = sshll.u32 %s90, 4
          %s101 = int_to_ptr.vmem [resolvable:$true] %s100
          %103 = dma.vmem_to_hbm [thread:$0]  %s101, 128, %s98, %s87
        $region34: #{tpu_custom_call.1} parent=11 // pred_fallthru
          _
      $region12: #{tpu_custom_call.1} parent=5 // pred_fallthru
        _
      %p104 = scmp.le.s32.totalorder 1, %s15
      // Predicated region
      $region35: #{tpu_custom_call.1} parent=5 // pred_check
        %p105 = pneg %p104
      $region36: #{tpu_custom_call.1} parent=5 // pred_check_branch
        %107 = sbr.rel (%p105) target = $region38
      $region37: #{tpu_custom_call.1} parent=5 // pred_region
        %s108 = ssub.s32 %s15, 1
        // Predicated region
        $region39: #{tpu_custom_call.1} parent=37 // pred_check
          %p109 = pneg %p36
        $region40: #{tpu_custom_call.1} parent=37 // pred_check_branch
          %111 = sbr.rel (%p109) target = $region42
        $region41: #{tpu_custom_call.1} parent=37 // pred_region
          %s112 = sand.u32 %s27, 1
          %s113 = scalar_lea.sflag [#allocation6], %s112
          %s114 = sand.u32 %s27, 1
          %s115 = smul.addr %s114, 8
          %s116 = scalar_lea.vmem [#allocation5], %s115
          %117 = dma.done %s113, 128
        $region42: #{tpu_custom_call.1} parent=37 // pred_fallthru
          _
      $region38: #{tpu_custom_call.1} parent=5 // pred_fallthru
        _
    $region6: #{tpu_custom_call.1} parent=1 // loop_footer
      %s19 = sadd.s32 1, %s15
    $region7: #{tpu_custom_call.1} parent=1 // loop_footer_branch
      %14 = sbr.rel target = $region3
    $region8: #{tpu_custom_call.1} parent=1 // loop_exit
      _
    %118 = vsyncpa [#allocation6], 1
    %s119 = scalar_lea.sflag [#allocation6], 1
    %120 = vsyncpa %s119, 1
  %121 = vsyncmov [#allocation2]
  %s122 = vpop.sfrf %121
  %p123 = scmp.eq.s32.totalorder %s122, 0
  %p124 = pneg %p123
  %126 = shalt.err (%p124)
  %s127 = scalar_lea.sflag [#allocation2], 1
  %128 = vsyncmov %s127
  %s129 = vpop.sfrf %128
  %p130 = scmp.eq.s32.totalorder %s129, 0
  %p131 = pneg %p130
  %133 = shalt.err (%p131)
  %s134 = scalar_lea.sflag [#allocation2], 2
  %135 = vsyncmov %s134
  %s136 = vpop.sfrf %135
  %p137 = scmp.eq.s32.totalorder %s136, 0
  %p138 = pneg %p137
  %140 = shalt.err (%p138)
  %s141 = scalar_lea.sflag [#allocation2], 3
  %142 = vsyncmov %s141
  %s143 = vpop.sfrf %142
  %p144 = scmp.eq.s32.totalorder %s143, 0
  %p145 = pneg %p144
  %147 = shalt.err (%p145)
  %s148 = scalar_lea.sflag [#allocation2], 4
  %149 = vsyncmov %s148
  %s150 = vpop.sfrf %149
  %p151 = scmp.eq.s32.totalorder %s150, 0
  %p152 = pneg %p151
  %154 = shalt.err (%p152)
  %s155 = scalar_lea.sflag [#allocation2], 5
  %156 = vsyncmov %s155
  %s157 = vpop.sfrf %156
  %p158 = scmp.eq.s32.totalorder %s157, 0
  %p159 = pneg %p158
  %161 = shalt.err (%p159)
  %s162 = scalar_lea.sflag [#allocation2], 6
  %163 = vsyncmov %s162
  %s164 = vpop.sfrf %163
  %p165 = scmp.eq.s32.totalorder %s164, 0
  %p166 = pneg %p165
  %168 = shalt.err (%p166)
  %s169 = scalar_lea.sflag [#allocation2], 7
  %170 = vsyncmov %s169
  %s171 = vpop.sfrf %170
  %p172 = scmp.eq.s32.totalorder %s171, 0
  %p173 = pneg %p172
  %175 = shalt.err (%p173)

</llo_original>
